<compile_context>
chip_gen: v7x
topology: tpu7x:2x2x1
jax: 0.10.0
libtpu: 0.0.40
codegen_flags: <defaults>
</compile_context>

<pallas_src>
import functools
import math

import jax
import jax.numpy as jnp
from jax.experimental import pallas as pl
from jax.experimental.pallas import tpu as pltpu


def _layernorm(h, gamma, beta, eps=1e-5):
    mean = jnp.mean(h, axis=-1, keepdims=True)
    var = jnp.mean((h - mean) ** 2, axis=-1, keepdims=True)
    return (h - mean) * jax.lax.rsqrt(var + eps) * gamma + beta


# --------------------------- call 1: attention + residual + norm1 ---------------------------

def _attn_norm1_kernel(x_ref, wqkv_ref, bqkv_ref, wo_ref, bo_ref, g1_ref, be1_ref,
                       h1_ref, *, num_heads, head_dim):
    S, E = x_ref.shape
    bf16 = jnp.bfloat16
    scale = 1.0 / math.sqrt(head_dim)

    x = x_ref[...].astype(jnp.float32)                              # (S, E)
    xb = x.astype(bf16)

    # Fused QKV projection: one MXU matmul with N = 3E (fully utilized MXU output width),
    # f32 accumulation; no broadcast copies of x.
    qkv = jnp.dot(xb, wqkv_ref[...], preferred_element_type=jnp.float32) + bqkv_ref[...]

    # Head split via static lane slices + leading-axis concat (no lane-splitting reshape,
    # no major-dim transpose inside the kernel).
    def split_heads(t2d):                                           # (S, E) -> (H, S, hd)
        return jnp.concatenate(
            [t2d[:, h * head_dim:(h + 1) * head_dim][None].astype(bf16)
             for h in range(num_heads)], axis=0)

    q = split_heads(qkv[:, :E])                                     # (H, S, hd) bf16
    k = split_heads(qkv[:, E:2 * E])
    v = split_heads(qkv[:, 2 * E:])

    # Batched-head attention; scores/probs in f32, matmul operands bf16.
    s = jnp.einsum("hqd,hkd->hqk", q, k,
                   preferred_element_type=jnp.float32) * scale      # (H, S, S)
    s = s - jnp.max(s, axis=-1, keepdims=True)
    p = jnp.exp(s)
    # EUP reciprocal instead of a VPU divide (~1e-3 rel. error; fine for this module).
    p = p * pl.reciprocal(jnp.sum(p, axis=-1, keepdims=True), approx=True)

    ctx = jnp.einsum("hqk,hkd->hqd", p.astype(bf16), v,
                     preferred_element_type=jnp.float32)            # (H, S, hd)

    # concat heads along lanes -> (S, E); single output projection with K = E
    # (== concat(heads) @ Wo; no (H,S,E) intermediate, no cross-head VPU sum).
    ctx_cat = jnp.concatenate([ctx[h] for h in range(num_heads)], axis=-1).astype(bf16)
    attn = jnp.dot(ctx_cat, wo_ref[...], preferred_element_type=jnp.float32) + bo_ref[...]

    h1_ref[...] = _layernorm(x + attn, g1_ref[...], be1_ref[...]).astype(h1_ref.dtype)


# --------------------------- call 2: FFN + residual + norm2 ---------------------------------

def _ffn_norm2_kernel(h1_ref, w1_ref, b1_ref, w2_ref, b2_ref, g2_ref, be2_ref,
                      o_ref, acc_ref, h1b_ref):
    f = pl.program_id(1)

    @pl.when(f == 0)
    def _init():
        acc_ref[...] = jnp.zeros_like(acc_ref)
        # Cast the resident h1 row tile to bf16 once per row tile, not once per FF step.
        h1b_ref[...] = h1_ref[...].astype(jnp.bfloat16)

    # Feed-forward, tiled over FF; ReLU commutes with the FF tiling.
    ff = jnp.dot(h1b_ref[...], w1_ref[...], preferred_element_type=jnp.float32) + b1_ref[...]
    ff = jnp.maximum(ff, 0.0)
    acc_ref[...] += jnp.dot(ff.astype(jnp.bfloat16), w2_ref[...],
                            preferred_element_type=jnp.float32)

    @pl.when(f == pl.num_programs(1) - 1)
    def _finish():
        h1 = h1_ref[...].astype(jnp.float32)
        out = _layernorm(h1 + acc_ref[...] + b2_ref[...], g2_ref[...], be2_ref[...])
        o_ref[...] = out.astype(o_ref.dtype)


# --------------------------------- wrapper ---------------------------------------------------

def _vmem_capacity_bytes():
    # Sizing heuristic only: a failed query falls back to the most conservative per-core
    # capacity (v7x: 64 MiB). This never masks kernel/lowering errors.
    try:
        return int(pltpu.get_tpu_info().vmem_capacity_bytes)
    except Exception:
        return 64 << 20


def _pick_row_tile(M):
    for cand in (512, 256, 128, 64, 32, 16, 8):
        if M % cand == 0:
            return cand
    return M  # full-extent block is always legal


def _pick_ff_tile(FF, E, budget_bytes, large_vmem):
    # 128 MiB parts (v5e/v6e): prefer 2048/1024 FF tiles (fewer per-step overheads, fewer
    # acc read-modify-write passes). 64 MiB parts (v7x): keep tiles <= 512.
    cands = (2048, 1024, 512, 256, 128) if large_vmem else (512, 256, 128)
    for cand in cands:
        if FF % cand == 0:
            tile_bytes = 2 * 2 * (E * cand + cand * E)  # double-buffered bf16 w1/w2 tiles
            if tile_bytes <= budget_bytes // 2:
                return cand
    return FF


def transformer_block(x, params, *, num_heads):
    """Pallas TPU forward pass of TransformerBlock (eval mode, mask=None)."""
    B, S, E = x.shape
    FF = params["w1"].shape[1]
    assert E % num_heads == 0, "embed_dim must be divisible by num_heads"
    hd = E // num_heads
    f32, bf16 = jnp.float32, jnp.bfloat16
    nbytes = lambda a: a.size * a.dtype.itemsize

    cap = _vmem_capacity_bytes()
    budget = int(cap * 0.78)               # leave headroom for compiler-internal scratch
    large_vmem = cap >= (96 << 20)

    # ---- host-side weight prep (y = x @ W + b convention; free, keeps kernels clean) ----
    wqkv = params["wqkv"].astype(bf16)                         # (E, 3E)
    bqkv = params["bqkv"].astype(f32).reshape(1, 3 * E)
    wo = params["wo"].astype(bf16)                             # (E, E)
    bo = params["bo"].astype(f32).reshape(1, E)
    g1 = params["g1"].astype(f32).reshape(1, E)
    be1 = params["be1"].astype(f32).reshape(1, E)
    w1 = params["w1"].astype(bf16)                             # (E, FF)
    fb1 = params["fb1"].astype(f32).reshape(1, FF)
    w2 = params["w2"].astype(bf16)                             # (FF, E)
    fb2 = params["fb2"].astype(f32).reshape(1, E)
    g2 = params["g2"].astype(f32).reshape(1, E)
    be2 = params["be2"].astype(f32).reshape(1, E)

    # ====================== call 1: attention + residual + norm1 =========================
    attn_kernel = functools.partial(_attn_norm1_kernel, num_heads=num_heads, head_dim=hd)

    def const1(shape):
        return pl.BlockSpec(shape, lambda b: (0,) * len(shape))

    attn_resident = 2 * sum(nbytes(a) for a in (wqkv, bqkv, wo, bo, g1, be1))
    attn_io = 2 * (S * E * x.dtype.itemsize + S * E * 4)
    attn_acts = (S * 3 * E * 4                       # qkv (f32)
                 + 3 * num_heads * S * hd * (4 + 2)  # q/k/v (f32 slices + bf16)
                 + 2 * num_heads * S * S * 4         # scores + probs
                 + num_heads * S * hd * 4            # ctx
                 + S * E * (4 + 2)                   # concat ctx
                 + 4 * S * E * 4)                    # x/attn/h1 temporaries
    attn_vmem = min(budget, max(16 << 20, attn_resident + attn_io + 2 * attn_acts + (4 << 20)))

    h1 = pl.pallas_call(
        attn_kernel,
        out_shape=jax.ShapeDtypeStruct((B, S, E), jnp.float32),
        grid_spec=pltpu.PrefetchScalarGridSpec(
            num_scalar_prefetch=0,
            grid=(B,),
            in_specs=[
                pl.BlockSpec((pl.Squeezed(), S, E), lambda b: (b, 0, 0)),  # x
                const1((E, 3 * E)),    # fused QKV weight
                const1((1, 3 * E)),    # fused QKV bias
                const1((E, E)),        # output projection
                const1((1, E)),        # output bias
                const1((1, E)),        # norm1 gamma
                const1((1, E)),        # norm1 beta
            ],
            out_specs=pl.BlockSpec((pl.Squeezed(), S, E), lambda b: (b, 0, 0)),
        ),
        compiler_params=pltpu.CompilerParams(
            dimension_semantics=("parallel",),
            vmem_limit_bytes=attn_vmem),
    )(x, wqkv, bqkv, wo, bo, g1, be1)

    # ====================== call 2: FFN + residual + norm2 ==============================
    M = B * S
    h1_2d = h1.reshape(M, E)
    tm = _pick_row_tile(M)
    tff = _pick_ff_tile(FF, E, budget, large_vmem)
    n_m, n_ff = M // tm, FF // tff

    ffn_vmem_est = (2 * (tm * E * 4)                      # h1 row tiles (double-buffered)
                    + 2 * 2 * E * tff * 2                 # w1 + w2 tiles (double-buffered bf16)
                    + 2 * (tff * 4)                       # b1 tiles
                    + 2 * sum(nbytes(a) for a in (fb2, g2, be2))
                    + 2 * (tm * E * x.dtype.itemsize)     # out tiles
                    + tm * E * (4 + 2)                    # acc (f32) + bf16 h1 scratch
                    + 2 * tm * tff * 4                    # ff activation
                    + (4 << 20))
    ffn_vmem = min(budget, max(16 << 20, ffn_vmem_est))

    def const2(shape):
        return pl.BlockSpec(shape, lambda m, f: (0,) * len(shape))

    out2d = pl.pallas_call(
        _ffn_norm2_kernel,
        out_shape=jax.ShapeDtypeStruct((M, E), x.dtype),
        grid_spec=pltpu.PrefetchScalarGridSpec(
            num_scalar_prefetch=0,
            # FF reduction innermost: each w1/w2 tile is streamed once per row tile,
            # not once per batch element.
            grid=(n_m, n_ff),
            in_specs=[
                pl.BlockSpec((tm, E), lambda m, f: (m, 0)),     # h1 rows (resident across f)
                pl.BlockSpec((E, tff), lambda m, f: (0, f)),    # w1 tile
                pl.BlockSpec((1, tff), lambda m, f: (0, f)),    # b1 tile
                pl.BlockSpec((tff, E), lambda m, f: (f, 0)),    # w2 tile
                const2((1, E)),        # b2
                const2((1, E)),        # norm2 gamma
                const2((1, E)),        # norm2 beta
            ],
            out_specs=pl.BlockSpec((tm, E), lambda m, f: (m, 0)),
            scratch_shapes=[pltpu.VMEM((tm, E), jnp.float32),    # FFN accumulator
                            pltpu.VMEM((tm, E), jnp.bfloat16)],  # bf16 copy of h1 rows
        ),
        compiler_params=pltpu.CompilerParams(
            dimension_semantics=("parallel", "arbitrary"),
            vmem_limit_bytes=ffn_vmem),
    )(h1_2d, w1, fb1, w2, fb2, g2, be2)

    return out2d.reshape(B, S, E)


# --------------------------------- pure-JAX reference ---------------------------------------

def transformer_block_ref(x, params, *, num_heads):
    """Pure-JAX f32 reference (same math as the PyTorch module in eval mode, mask=None)."""
    B, S, E = x.shape
    hd = E // num_heads
    qkv = x @ params["wqkv"] + params["bqkv"]
    q, k, v = qkv[..., :E], qkv[..., E:2 * E], qkv[..., 2 * E:]
    q = q.reshape(B, S, num_heads, hd).transpose(0, 2, 1, 3) / math.sqrt(hd)
    k = k.reshape(B, S, num_heads, hd).transpose(0, 2, 1, 3)
    v = v.reshape(B, S, num_heads, hd).transpose(0, 2, 1, 3)
    s = jnp.einsum("bhqd,bhkd->bhqk", q, k)
    p = jax.nn.softmax(s, axis=-1)
    attn = jnp.einsum("bhqk,bhkd->bhqd", p, v).transpose(0, 2, 1, 3).reshape(B, S, E)
    attn = attn @ params["wo"] + params["bo"]

    def ln(h, g, b):
        m = jnp.mean(h, axis=-1, keepdims=True)
        var = jnp.mean((h - m) ** 2, axis=-1, keepdims=True)
        return (h - m) / jnp.sqrt(var + 1e-5) * g + b

    h1 = ln(x + attn, params["g1"], params["be1"])
    ff = jnp.maximum(h1 @ params["w1"] + params["fb1"], 0.0) @ params["w2"] + params["fb2"]
    return ln(h1 + ff, params["g2"], params["be2"])


def init_params(key, embed_dim, ff_dim):
    ks = jax.random.split(key, 6)
    return {
        # Stored pre-transposed so y = x @ W (+ b).
        "wqkv": jax.random.normal(ks[0], (embed_dim, 3 * embed_dim), jnp.float32) * 0.1,
        "bqkv": jax.random.normal(ks[1], (1, 3 * embed_dim), jnp.float32) * 0.02,
        "wo":   jax.random.normal(ks[2], (embed_dim, embed_dim), jnp.float32) * 0.1,
        "bo":   jnp.zeros((1, embed_dim), jnp.float32),
        "g1":   jnp.ones((1, embed_dim), jnp.float32),
        "be1":  jnp.zeros((1, embed_dim), jnp.float32),
        "w1":   jax.random.normal(ks[3], (embed_dim, ff_dim), jnp.float32) * 0.1,
        "fb1":  jax.random.normal(ks[4], (1, ff_dim), jnp.float32) * 0.02,
        "w2":   jax.random.normal(ks[5], (ff_dim, embed_dim), jnp.float32) * 0.1,
        "fb2":  jnp.zeros((1, embed_dim), jnp.float32),
        "g2":   jnp.ones((1, embed_dim), jnp.float32),
        "be2":  jnp.zeros((1, embed_dim), jnp.float32),
    }


if __name__ == "__main__":
    # Small shapes: batch=2, seq=8, embed=32, heads=4, ff=256.
    B, S, E, H, FF = 2, 8, 32, 4, 256

    key = jax.random.PRNGKey(0)
    kx, kp = jax.random.split(key)
    x = jax.random.normal(kx, (B, S, E), jnp.float32)
    params = init_params(kp, E, FF)

    out = transformer_block(x, params, num_heads=H)
    out = jax.block_until_ready(out)

    ref = transformer_block_ref(x, params, num_heads=H)
    assert out.shape == (B, S, E)
    err = float(jnp.max(jnp.abs(out - ref)))
    # bf16 matmul operands (f32 accumulation) + approx reciprocal vs full-f32 reference.
    assert err < 5e-2, f"mismatch vs pure-JAX reference: max abs err {err}"

    print("KERNEL_OK")
</pallas_src>

<mosaic_0001>
module attributes {stable_mosaic.version = 11 : i64} {
  func.func @_attn_norm1_kernel(%arg0: i32, %arg1: memref<1x8x32xf32, #tpu.memory_space<vmem>>, %arg2: memref<32x96xbf16, #tpu.memory_space<vmem>>, %arg3: memref<1x96xf32, #tpu.memory_space<vmem>>, %arg4: memref<32x32xbf16, #tpu.memory_space<vmem>>, %arg5: memref<1x32xf32, #tpu.memory_space<vmem>>, %arg6: memref<1x32xf32, #tpu.memory_space<vmem>>, %arg7: memref<1x32xf32, #tpu.memory_space<vmem>>, %arg8: memref<1x8x32xf32, #tpu.memory_space<vmem>>) attributes {dimension_semantics = [#tpu.dimension_semantics<parallel>], iteration_bounds = array<i64: 2>, scalar_prefetch = 0 : i64, scratch_operands = 0 : i64, tpu.core_type = #tpu.core_type<tc>, window_params = [{transform_indices = @transform_0, window_bounds = array<i64: 1, 8, 32>}, {pipeline_mode = #tpu.pipeline_mode<synchronous>, transform_indices = @transform_1, window_bounds = array<i64: 32, 96>}, {pipeline_mode = #tpu.pipeline_mode<synchronous>, transform_indices = @transform_2, window_bounds = array<i64: 1, 96>}, {pipeline_mode = #tpu.pipeline_mode<synchronous>, transform_indices = @transform_3, window_bounds = array<i64: 32, 32>}, {pipeline_mode = #tpu.pipeline_mode<synchronous>, transform_indices = @transform_4, window_bounds = array<i64: 1, 32>}, {pipeline_mode = #tpu.pipeline_mode<synchronous>, transform_indices = @transform_5, window_bounds = array<i64: 1, 32>}, {pipeline_mode = #tpu.pipeline_mode<synchronous>, transform_indices = @transform_6, window_bounds = array<i64: 1, 32>}, {transform_indices = @transform_7, window_bounds = array<i64: 1, 8, 32>}]} {
    %c0 = arith.constant 0 : index
    %c0_0 = arith.constant 0 : index
    %c0_1 = arith.constant 0 : index
    %0 = vector.load %arg1[%c0, %c0_0, %c0_1] : memref<1x8x32xf32, #tpu.memory_space<vmem>>, vector<1x8x32xf32>
    %1 = vector.shape_cast %0 : vector<1x8x32xf32> to vector<8x32xf32>
    %2 = arith.truncf %1 : vector<8x32xf32> to vector<8x32xbf16>
    %c0_2 = arith.constant 0 : index
    %c0_3 = arith.constant 0 : index
    %3 = vector.load %arg2[%c0_2, %c0_3] : memref<32x96xbf16, #tpu.memory_space<vmem>>, vector<32x96xbf16>
    %cst = arith.constant dense<0.000000e+00> : vector<8x96xf32>
    %4 = tpu.matmul %2, %3, %cst {dimension_numbers = #tpu.dot_dimension_numbers<[1], [0], [0], [1], [0, 0, 1, 1], [], []>} : vector<8x32xbf16>, vector<32x96xbf16>, vector<8x96xf32> -> vector<8x96xf32>
    %c0_4 = arith.constant 0 : index
    %c0_5 = arith.constant 0 : index
    %5 = vector.load %arg3[%c0_4, %c0_5] : memref<1x96xf32, #tpu.memory_space<vmem>>, vector<1x96xf32>
    %6 = vector.broadcast %5 : vector<1x96xf32> to vector<8x96xf32>
    %7 = arith.addf %4, %6 : vector<8x96xf32>
    %8 = vector.extract_strided_slice %7 {offsets = [0, 0], sizes = [8, 32], strides = [1, 1]} : vector<8x96xf32> to vector<8x32xf32>
    %9 = vector.extract_strided_slice %8 {offsets = [0, 0], sizes = [8, 8], strides = [1, 1]} : vector<8x32xf32> to vector<8x8xf32>
    %10 = vector.shape_cast %9 : vector<8x8xf32> to vector<1x8x8xf32>
    %11 = arith.truncf %10 : vector<1x8x8xf32> to vector<1x8x8xbf16>
    %12 = vector.extract_strided_slice %8 {offsets = [0, 8], sizes = [8, 8], strides = [1, 1]} : vector<8x32xf32> to vector<8x8xf32>
    %13 = vector.shape_cast %12 : vector<8x8xf32> to vector<1x8x8xf32>
    %14 = arith.truncf %13 : vector<1x8x8xf32> to vector<1x8x8xbf16>
    %15 = vector.extract_strided_slice %8 {offsets = [0, 16], sizes = [8, 8], strides = [1, 1]} : vector<8x32xf32> to vector<8x8xf32>
    %16 = vector.shape_cast %15 : vector<8x8xf32> to vector<1x8x8xf32>
    %17 = arith.truncf %16 : vector<1x8x8xf32> to vector<1x8x8xbf16>
    %18 = vector.extract_strided_slice %8 {offsets = [0, 24], sizes = [8, 8], strides = [1, 1]} : vector<8x32xf32> to vector<8x8xf32>
    %19 = vector.shape_cast %18 : vector<8x8xf32> to vector<1x8x8xf32>
    %20 = arith.truncf %19 : vector<1x8x8xf32> to vector<1x8x8xbf16>
    %21 = tpu.concatenate %11, %14, %17, %20 in 0 : vector<1x8x8xbf16>, vector<1x8x8xbf16>, vector<1x8x8xbf16>, vector<1x8x8xbf16> -> vector<4x8x8xbf16>
    %22 = vector.extract_strided_slice %7 {offsets = [0, 32], sizes = [8, 32], strides = [1, 1]} : vector<8x96xf32> to vector<8x32xf32>
    %23 = vector.extract_strided_slice %22 {offsets = [0, 0], sizes = [8, 8], strides = [1, 1]} : vector<8x32xf32> to vector<8x8xf32>
    %24 = vector.shape_cast %23 : vector<8x8xf32> to vector<1x8x8xf32>
    %25 = arith.truncf %24 : vector<1x8x8xf32> to vector<1x8x8xbf16>
    %26 = vector.extract_strided_slice %22 {offsets = [0, 8], sizes = [8, 8], strides = [1, 1]} : vector<8x32xf32> to vector<8x8xf32>
    %27 = vector.shape_cast %26 : vector<8x8xf32> to vector<1x8x8xf32>
    %28 = arith.truncf %27 : vector<1x8x8xf32> to vector<1x8x8xbf16>
    %29 = vector.extract_strided_slice %22 {offsets = [0, 16], sizes = [8, 8], strides = [1, 1]} : vector<8x32xf32> to vector<8x8xf32>
    %30 = vector.shape_cast %29 : vector<8x8xf32> to vector<1x8x8xf32>
    %31 = arith.truncf %30 : vector<1x8x8xf32> to vector<1x8x8xbf16>
    %32 = vector.extract_strided_slice %22 {offsets = [0, 24], sizes = [8, 8], strides = [1, 1]} : vector<8x32xf32> to vector<8x8xf32>
    %33 = vector.shape_cast %32 : vector<8x8xf32> to vector<1x8x8xf32>
    %34 = arith.truncf %33 : vector<1x8x8xf32> to vector<1x8x8xbf16>
    %35 = tpu.concatenate %25, %28, %31, %34 in 0 : vector<1x8x8xbf16>, vector<1x8x8xbf16>, vector<1x8x8xbf16>, vector<1x8x8xbf16> -> vector<4x8x8xbf16>
    %36 = vector.extract_strided_slice %7 {offsets = [0, 64], sizes = [8, 32], strides = [1, 1]} : vector<8x96xf32> to vector<8x32xf32>
    %37 = vector.extract_strided_slice %36 {offsets = [0, 0], sizes = [8, 8], strides = [1, 1]} : vector<8x32xf32> to vector<8x8xf32>
    %38 = vector.shape_cast %37 : vector<8x8xf32> to vector<1x8x8xf32>
    %39 = arith.truncf %38 : vector<1x8x8xf32> to vector<1x8x8xbf16>
    %40 = vector.extract_strided_slice %36 {offsets = [0, 8], sizes = [8, 8], strides = [1, 1]} : vector<8x32xf32> to vector<8x8xf32>
    %41 = vector.shape_cast %40 : vector<8x8xf32> to vector<1x8x8xf32>
    %42 = arith.truncf %41 : vector<1x8x8xf32> to vector<1x8x8xbf16>
    %43 = vector.extract_strided_slice %36 {offsets = [0, 16], sizes = [8, 8], strides = [1, 1]} : vector<8x32xf32> to vector<8x8xf32>
    %44 = vector.shape_cast %43 : vector<8x8xf32> to vector<1x8x8xf32>
    %45 = arith.truncf %44 : vector<1x8x8xf32> to vector<1x8x8xbf16>
    %46 = vector.extract_strided_slice %36 {offsets = [0, 24], sizes = [8, 8], strides = [1, 1]} : vector<8x32xf32> to vector<8x8xf32>
    %47 = vector.shape_cast %46 : vector<8x8xf32> to vector<1x8x8xf32>
    %48 = arith.truncf %47 : vector<1x8x8xf32> to vector<1x8x8xbf16>
    %49 = tpu.concatenate %39, %42, %45, %48 in 0 : vector<1x8x8xbf16>, vector<1x8x8xbf16>, vector<1x8x8xbf16>, vector<1x8x8xbf16> -> vector<4x8x8xbf16>
    "tpu.trace_start"() <{level = 10 : i32, message = "hqd,hkd->hqk"}> : () -> ()
    %cst_6 = arith.constant dense<0.000000e+00> : vector<4x8x8xf32>
    %50 = tpu.matmul %21, %35, %cst_6 {dimension_numbers = #tpu.dot_dimension_numbers<[2], [2], [1], [1], [0, 0, 0, 1, 1, 1], [0], [0]>} : vector<4x8x8xbf16>, vector<4x8x8xbf16>, vector<4x8x8xf32> -> vector<4x8x8xf32>
    "tpu.trace_stop"() : () -> ()
    %cst_7 = arith.constant 0.353553385 : f32
    %51 = vector.broadcast %cst_7 : f32 to vector<4x8x8xf32>
    %52 = arith.mulf %50, %51 : vector<4x8x8xf32>
    %cst_8 = arith.constant dense<0xFF800000> : vector<4x8xf32>
    %53 = vector.multi_reduction <maximumf>, %52, %cst_8 [2] : vector<4x8x8xf32> to vector<4x8xf32>
    %54 = vector.shape_cast %53 : vector<4x8xf32> to vector<4x8x1xf32>
    %55 = vector.broadcast %54 : vector<4x8x1xf32> to vector<4x8x8xf32>
    %56 = arith.subf %52, %55 : vector<4x8x8xf32>
    %57 = math.exp %56 : vector<4x8x8xf32>
    %cst_9 = arith.constant dense<0.000000e+00> : vector<4x8xf32>
    %58 = vector.multi_reduction <add>, %57, %cst_9 [2] : vector<4x8x8xf32> to vector<4x8xf32>
    %59 = vector.shape_cast %58 : vector<4x8xf32> to vector<4x8x1xf32>
    %60 = tpu.reciprocal %59 {approx = true} : vector<4x8x1xf32> -> vector<4x8x1xf32>
    %61 = vector.broadcast %60 : vector<4x8x1xf32> to vector<4x8x8xf32>
    %62 = arith.mulf %57, %61 : vector<4x8x8xf32>
    %63 = arith.truncf %62 : vector<4x8x8xf32> to vector<4x8x8xbf16>
    "tpu.trace_start"() <{level = 10 : i32, message = "hqk,hkd->hqd"}> : () -> ()
    %cst_10 = arith.constant dense<0.000000e+00> : vector<4x8x8xf32>
    %64 = tpu.matmul %63, %49, %cst_10 {dimension_numbers = #tpu.dot_dimension_numbers<[2], [1], [1], [2], [0, 0, 0, 1, 1, 2], [0], [0]>} : vector<4x8x8xbf16>, vector<4x8x8xbf16>, vector<4x8x8xf32> -> vector<4x8x8xf32>
    "tpu.trace_stop"() : () -> ()
    %65 = vector.extract_strided_slice %64 {offsets = [0, 0, 0], sizes = [1, 8, 8], strides = [1, 1, 1]} : vector<4x8x8xf32> to vector<1x8x8xf32>
    %66 = vector.shape_cast %65 : vector<1x8x8xf32> to vector<8x8xf32>
    %67 = vector.extract_strided_slice %64 {offsets = [1, 0, 0], sizes = [1, 8, 8], strides = [1, 1, 1]} : vector<4x8x8xf32> to vector<1x8x8xf32>
    %68 = vector.shape_cast %67 : vector<1x8x8xf32> to vector<8x8xf32>
    %69 = vector.extract_strided_slice %64 {offsets = [2, 0, 0], sizes = [1, 8, 8], strides = [1, 1, 1]} : vector<4x8x8xf32> to vector<1x8x8xf32>
    %70 = vector.shape_cast %69 : vector<1x8x8xf32> to vector<8x8xf32>
    %71 = vector.extract_strided_slice %64 {offsets = [3, 0, 0], sizes = [1, 8, 8], strides = [1, 1, 1]} : vector<4x8x8xf32> to vector<1x8x8xf32>
    %72 = vector.shape_cast %71 : vector<1x8x8xf32> to vector<8x8xf32>
    %73 = tpu.concatenate %66, %68, %70, %72 in 1 : vector<8x8xf32>, vector<8x8xf32>, vector<8x8xf32>, vector<8x8xf32> -> vector<8x32xf32>
    %74 = arith.truncf %73 : vector<8x32xf32> to vector<8x32xbf16>
    %c0_11 = arith.constant 0 : index
    %c0_12 = arith.constant 0 : index
    %75 = vector.load %arg4[%c0_11, %c0_12] : memref<32x32xbf16, #tpu.memory_space<vmem>>, vector<32x32xbf16>
    %cst_13 = arith.constant dense<0.000000e+00> : vector<8x32xf32>
    %76 = tpu.matmul %74, %75, %cst_13 {dimension_numbers = #tpu.dot_dimension_numbers<[1], [0], [0], [1], [0, 0, 1, 1], [], []>} : vector<8x32xbf16>, vector<32x32xbf16>, vector<8x32xf32> -> vector<8x32xf32>
    %c0_14 = arith.constant 0 : index
    %c0_15 = arith.constant 0 : index
    %77 = vector.load %arg5[%c0_14, %c0_15] : memref<1x32xf32, #tpu.memory_space<vmem>>, vector<1x32xf32>
    %78 = vector.broadcast %77 : vector<1x32xf32> to vector<8x32xf32>
    %79 = arith.addf %76, %78 : vector<8x32xf32>
    %80 = arith.addf %1, %79 : vector<8x32xf32>
    %c0_16 = arith.constant 0 : index
    %c0_17 = arith.constant 0 : index
    %81 = vector.load %arg6[%c0_16, %c0_17] : memref<1x32xf32, #tpu.memory_space<vmem>>, vector<1x32xf32>
    %c0_18 = arith.constant 0 : index
    %c0_19 = arith.constant 0 : index
    %82 = vector.load %arg7[%c0_18, %c0_19] : memref<1x32xf32, #tpu.memory_space<vmem>>, vector<1x32xf32>
    %cst_20 = arith.constant dense<0.000000e+00> : vector<8xf32>
    %83 = vector.multi_reduction <add>, %80, %cst_20 [1] : vector<8x32xf32> to vector<8xf32>
    %84 = vector.shape_cast %83 : vector<8xf32> to vector<8x1xf32>
    %cst_21 = arith.constant 3.200000e+01 : f32
    %85 = vector.broadcast %cst_21 : f32 to vector<8x1xf32>
    %86 = arith.divf %84, %85 : vector<8x1xf32>
    %87 = vector.broadcast %86 : vector<8x1xf32> to vector<8x32xf32>
    %88 = arith.subf %80, %87 : vector<8x32xf32>
    %89 = arith.mulf %88, %88 : vector<8x32xf32>
    %cst_22 = arith.constant dense<0.000000e+00> : vector<8xf32>
    %90 = vector.multi_reduction <add>, %89, %cst_22 [1] : vector<8x32xf32> to vector<8xf32>
    %91 = vector.shape_cast %90 : vector<8xf32> to vector<8x1xf32>
    %cst_23 = arith.constant 3.200000e+01 : f32
    %92 = vector.broadcast %cst_23 : f32 to vector<8x1xf32>
    %93 = arith.divf %91, %92 : vector<8x1xf32>
    %94 = vector.broadcast %86 : vector<8x1xf32> to vector<8x32xf32>
    %95 = arith.subf %80, %94 : vector<8x32xf32>
    %cst_24 = arith.constant 9.99999974E-6 : f32
    %96 = vector.broadcast %cst_24 : f32 to vector<8x1xf32>
    %97 = arith.addf %93, %96 : vector<8x1xf32>
    %98 = math.rsqrt %97 : vector<8x1xf32>
    %99 = vector.broadcast %98 : vector<8x1xf32> to vector<8x32xf32>
    %100 = arith.mulf %95, %99 : vector<8x32xf32>
    %101 = vector.broadcast %81 : vector<1x32xf32> to vector<8x32xf32>
    %102 = arith.mulf %100, %101 : vector<8x32xf32>
    %103 = vector.broadcast %82 : vector<1x32xf32> to vector<8x32xf32>
    %104 = arith.addf %102, %103 : vector<8x32xf32>
    %c0_25 = arith.constant 0 : index
    %c0_26 = arith.constant 0 : index
    %c0_27 = arith.constant 0 : index
    %105 = vector.load %arg8[%c0_25, %c0_26, %c0_27] : memref<1x8x32xf32, #tpu.memory_space<vmem>>, vector<1x8x32xf32>
    %106 = vector.shape_cast %105 : vector<1x8x32xf32> to vector<8x32xf32>
    %107 = vector.shape_cast %104 : vector<8x32xf32> to vector<1x8x32xf32>
    tpu.vector_store %arg8[%c0_25, %c0_26, %c0_27], %107 {strides = array<i32>} : memref<1x8x32xf32, #tpu.memory_space<vmem>>, vector<1x8x32xf32>,
    return
  }
  func.func @transform_0(%arg0: i32) -> (i32, i32, i32) {
    %c0_i32 = arith.constant 0 : i32
    %c0_i32_0 = arith.constant 0 : i32
    %c0_i32_1 = arith.constant 0 : i32
    return %arg0, %c0_i32, %c0_i32_0 : i32, i32, i32
  }
  func.func @transform_1(%arg0: i32) -> (i32, i32) {
    %c0_i32 = arith.constant 0 : i32
    %c0_i32_0 = arith.constant 0 : i32
    %c0_i32_1 = arith.constant 0 : i32
    return %c0_i32, %c0_i32_0 : i32, i32
  }
  func.func @transform_2(%arg0: i32) -> (i32, i32) {
    %c0_i32 = arith.constant 0 : i32
    %c0_i32_0 = arith.constant 0 : i32
    %c0_i32_1 = arith.constant 0 : i32
    return %c0_i32, %c0_i32_0 : i32, i32
  }
  func.func @transform_3(%arg0: i32) -> (i32, i32) {
    %c0_i32 = arith.constant 0 : i32
    %c0_i32_0 = arith.constant 0 : i32
    %c0_i32_1 = arith.constant 0 : i32
    return %c0_i32, %c0_i32_0 : i32, i32
  }
  func.func @transform_4(%arg0: i32) -> (i32, i32) {
    %c0_i32 = arith.constant 0 : i32
    %c0_i32_0 = arith.constant 0 : i32
    %c0_i32_1 = arith.constant 0 : i32
    return %c0_i32, %c0_i32_0 : i32, i32
  }
  func.func @transform_5(%arg0: i32) -> (i32, i32) {
    %c0_i32 = arith.constant 0 : i32
    %c0_i32_0 = arith.constant 0 : i32
    %c0_i32_1 = arith.constant 0 : i32
    return %c0_i32, %c0_i32_0 : i32, i32
  }
  func.func @transform_6(%arg0: i32) -> (i32, i32) {
    %c0_i32 = arith.constant 0 : i32
    %c0_i32_0 = arith.constant 0 : i32
    %c0_i32_1 = arith.constant 0 : i32
    return %c0_i32, %c0_i32_0 : i32, i32
  }
  func.func @transform_7(%arg0: i32) -> (i32, i32, i32) {
    %c0_i32 = arith.constant 0 : i32
    %c0_i32_0 = arith.constant 0 : i32
    %c0_i32_1 = arith.constant 0 : i32
    return %arg0, %c0_i32, %c0_i32_0 : i32, i32, i32
  }
}

</mosaic_0001>

<llo_original>
// kernel: tpu_custom_call.1
$region0: #{tpu_custom_call.1}
  #allocation0 [shape = 'u32[]', space=smem, size = 0x4, offset = 0x4, fixed_abs, tag = 'smem constant byte address 0x4 - core index']
  #allocation1 [shape = 'u32[144,128]{1,0:T(1,128)}', space=vmem, size = 0x12000, scoped, tag = 'internal scratch']
  %s0 = inlined_call_operand.hbm [shape: f32[2,8,32], index: 0, kind: input, shape index: {}]
  %s1 = inlined_call_operand.hbm [shape: bf16[32,96], index: 1, kind: input, shape index: {}]
  %s2 = inlined_call_operand.vmem [shape: f32[1,96], index: 2, kind: input, shape index: {}]
  %s3 = inlined_call_operand.hbm [shape: bf16[32,32], index: 3, kind: input, shape index: {}]
  %s4 = inlined_call_operand.vmem [shape: f32[1,32], index: 4, kind: input, shape index: {}]
  %s5 = inlined_call_operand.vmem [shape: f32[1,32], index: 5, kind: input, shape index: {}]
  %s6 = inlined_call_operand.vmem [shape: f32[1,32], index: 6, kind: input, shape index: {}]
  %s7 = inlined_call_operand.hbm [shape: f32[2,8,32], index: 7, kind: output, shape index: {}]
  %s8 = sld [smem:[#allocation0]]
  $region73: #{tpu_custom_call.1} parent=0
    _
  %s10 = ssub.s32 1, %s8
  %s11 = scalar_select 0, %s10, %s8
  $region1: #{tpu_custom_call.1} parent=0
    #allocation2 [shape = 'u8[8192]{0}', space=vmem, size = 0x2000, scoped, tag = 'input window, operand 0']
    #allocation3 [shape = 's32[2]{0}', space=sflag, size = 0x8, scoped, tag = 'scoped memory for tpu_custom_call.1']
    #allocation4 [shape = 's32[2]{0}', space=sflag, size = 0x8, scoped, tag = 'scoped memory for tpu_custom_call.1']
    #allocation5 [shape = 'u8[8192]{0}', space=vmem, size = 0x2000, scoped, tag = 'input window, operand 1, single buffered']
    #allocation6 [shape = 's32[1]{0}', space=sflag, size = 0x4, scoped, tag = 'scoped memory for tpu_custom_call.1']
    #allocation7 [shape = 'u8[8192]{0}', space=vmem, size = 0x2000, scoped, tag = 'input window, operand 3, single buffered']
    #allocation8 [shape = 'u8[8192]{0}', space=vmem, size = 0x2000, scoped, tag = 'output window, operand 0']
    %12 = vsyncpa [#allocation3], 0
    %s13 = scalar_lea.sflag [#allocation3], 1
    %14 = vsyncpa %s13, 0
    %15 = vsyncpa [#allocation6], 0
    %16 = vsyncpa [#allocation4], 0
    %s17 = scalar_lea.sflag [#allocation4], 1
    %18 = vsyncpa %s17, 0
    loop: start=0, step=1, limit=4
    $region2: #{tpu_custom_call.1} parent=1 // loop_pre_header
      _
    $region3: #{tpu_custom_call.1} parent=1 // loop_header
      %s20 = sphi 0, %s24
      %p21 = scmp.ge.s32.totalorder %s20, 4
      %s30 = sphi 0, %s32
      %s33 = sphi 0, %s30
      %s34 = sphi 0, %s33
      %s50 = sphi 0, %s34
      %s54 = sphi 0, %s54
      %s56 = sphi 0, %s54
      %s57 = sphi 0, %s56
      %s71 = sphi 0, %s57
      %s75 = sphi 0, %s75
      %s77 = sphi 0, %s75
      %s78 = sphi 0, %s77
      %s92 = sphi 0, %s78
      %s96 = sphi 0, %s96
      %s98 = sphi 0, %s96
      %s99 = sphi 0, %s98
      %s113 = sphi 0, %s99
      %s117 = sphi 0, %s117
      %s119 = sphi 0, %s117
      %s120 = sphi 0, %s119
      %s134 = sphi 0, %s120
      %s138 = sphi 0, %s138
      %s140 = sphi 0, %s138
      %s141 = sphi 0, %s140
      %s155 = sphi 0, %s141
      %s159 = sphi 0, %s159
      %s161 = sphi 0, %s159
      %s162 = sphi 0, %s161
      %s176 = sphi 0, %s162
      %s182 = sphi 0, %s184
      %s185 = sphi 0, %s182
      %s186 = sphi 0, %s185
      %s202 = sphi 0, %s186
    $region4: #{tpu_custom_call.1} parent=1 // loop_header_branch
      %23 = sbr.rel (%p21) target = $region8
    $region5: #{tpu_custom_call.1} parent=1 // loop_body
      %s25 = ssub.s32 %s20, 1
      %s26 = ssub.s32 %s20, 2
      %s27 = sadd.s32 %s20, 1
      %s28 = ssub.s32 %s20, %s27
      %p29 = scmp.eq.s32.totalorder %s28, 0
      %s31 = sadd.s32 %s30, 1
      %s32 = scalar_select %p29, %s30, %s31
      %p35 = pneg %p29
      %p36 = scmp.eq.s32.totalorder %s20, 1
      %p37 = por %p35, %p36
      %p38 = scmp.ne.s32.totalorder %s30, %s33
      %p39 = scmp.eq.s32.totalorder %s20, 0
      %p40 = por %p38, %p39
      %p41 = scmp.ne.s32.totalorder %s30, %s33
      %p42 = scmp.eq.s32.totalorder %s25, 1
      %p43 = por %p41, %p42
      %p44 = scmp.ne.s32.totalorder %s33, %s34
      %p45 = scmp.eq.s32.totalorder %s25, 0
      %p46 = por %p44, %p45
      %p47 = scmp.ne.s32.totalorder %s33, %s34
      %p48 = scmp.eq.s32.totalorder %s26, 1
      %p49 = por %p47, %p48
      %p51 = scmp.ne.s32.totalorder %s34, %s50
      %p52 = scmp.eq.s32.totalorder %s26, 0
      %p53 = por %p51, %p52
      %s55 = sadd.s32 %s54, 1
      %p58 = scmp.eq.s32.totalorder %s20, 1
      %p59 = scmp.ne.s32.totalorder %s54, %s56
      %p60 = scmp.eq.s32.totalorder %s20, 0
      %p61 = por %p59, %p60
      %p62 = scmp.ne.s32.totalorder %s54, %s56
      %p63 = scmp.eq.s32.totalorder %s25, 1
      %p64 = por %p62, %p63
      %p65 = scmp.ne.s32.totalorder %s56, %s57
      %p66 = scmp.eq.s32.totalorder %s25, 0
      %p67 = por %p65, %p66
      %p68 = scmp.ne.s32.totalorder %s56, %s57
      %p69 = scmp.eq.s32.totalorder %s26, 1
      %p70 = por %p68, %p69
      %p72 = scmp.ne.s32.totalorder %s57, %s71
      %p73 = scmp.eq.s32.totalorder %s26, 0
      %p74 = por %p72, %p73
      %s76 = sadd.s32 %s75, 1
      %p79 = scmp.eq.s32.totalorder %s20, 1
      %p80 = scmp.ne.s32.totalorder %s75, %s77
      %p81 = scmp.eq.s32.totalorder %s20, 0
      %p82 = por %p80, %p81
      %p83 = scmp.ne.s32.totalorder %s75, %s77
      %p84 = scmp.eq.s32.totalorder %s25, 1
      %p85 = por %p83, %p84
      %p86 = scmp.ne.s32.totalorder %s77, %s78
      %p87 = scmp.eq.s32.totalorder %s25, 0
      %p88 = por %p86, %p87
      %p89 = scmp.ne.s32.totalorder %s77, %s78
      %p90 = scmp.eq.s32.totalorder %s26, 1
      %p91 = por %p89, %p90
      %p93 = scmp.ne.s32.totalorder %s78, %s92
      %p94 = scmp.eq.s32.totalorder %s26, 0
      %p95 = por %p93, %p94
      %s97 = sadd.s32 %s96, 1
      %p100 = scmp.eq.s32.totalorder %s20, 1
      %p101 = scmp.ne.s32.totalorder %s96, %s98
      %p102 = scmp.eq.s32.totalorder %s20, 0
      %p103 = por %p101, %p102
      %p104 = scmp.ne.s32.totalorder %s96, %s98
      %p105 = scmp.eq.s32.totalorder %s25, 1
      %p106 = por %p104, %p105
      %p107 = scmp.ne.s32.totalorder %s98, %s99
      %p108 = scmp.eq.s32.totalorder %s25, 0
      %p109 = por %p107, %p108
      %p110 = scmp.ne.s32.totalorder %s98, %s99
      %p111 = scmp.eq.s32.totalorder %s26, 1
      %p112 = por %p110, %p111
      %p114 = scmp.ne.s32.totalorder %s99, %s113
      %p115 = scmp.eq.s32.totalorder %s26, 0
      %p116 = por %p114, %p115
      %s118 = sadd.s32 %s117, 1
      %p121 = scmp.eq.s32.totalorder %s20, 1
      %p122 = scmp.ne.s32.totalorder %s117, %s119
      %p123 = scmp.eq.s32.totalorder %s20, 0
      %p124 = por %p122, %p123
      %p125 = scmp.ne.s32.totalorder %s117, %s119
      %p126 = scmp.eq.s32.totalorder %s25, 1
      %p127 = por %p125, %p126
      %p128 = scmp.ne.s32.totalorder %s119, %s120
      %p129 = scmp.eq.s32.totalorder %s25, 0
      %p130 = por %p128, %p129
      %p131 = scmp.ne.s32.totalorder %s119, %s120
      %p132 = scmp.eq.s32.totalorder %s26, 1
      %p133 = por %p131, %p132
      %p135 = scmp.ne.s32.totalorder %s120, %s134
      %p136 = scmp.eq.s32.totalorder %s26, 0
      %p137 = por %p135, %p136
      %s139 = sadd.s32 %s138, 1
      %p142 = scmp.eq.s32.totalorder %s20, 1
      %p143 = scmp.ne.s32.totalorder %s138, %s140
      %p144 = scmp.eq.s32.totalorder %s20, 0
      %p145 = por %p143, %p144
      %p146 = scmp.ne.s32.totalorder %s138, %s140
      %p147 = scmp.eq.s32.totalorder %s25, 1
      %p148 = por %p146, %p147
      %p149 = scmp.ne.s32.totalorder %s140, %s141
      %p150 = scmp.eq.s32.totalorder %s25, 0
      %p151 = por %p149, %p150
      %p152 = scmp.ne.s32.totalorder %s140, %s141
      %p153 = scmp.eq.s32.totalorder %s26, 1
      %p154 = por %p152, %p153
      %p156 = scmp.ne.s32.totalorder %s141, %s155
      %p157 = scmp.eq.s32.totalorder %s26, 0
      %p158 = por %p156, %p157
      %s160 = sadd.s32 %s159, 1
      %p163 = scmp.eq.s32.totalorder %s20, 1
      %p164 = scmp.ne.s32.totalorder %s159, %s161
      %p165 = scmp.eq.s32.totalorder %s20, 0
      %p166 = por %p164, %p165
      %p167 = scmp.ne.s32.totalorder %s159, %s161
      %p168 = scmp.eq.s32.totalorder %s25, 1
      %p169 = por %p167, %p168
      %p170 = scmp.ne.s32.totalorder %s161, %s162
      %p171 = scmp.eq.s32.totalorder %s25, 0
      %p172 = por %p170, %p171
      %p173 = scmp.ne.s32.totalorder %s161, %s162
      %p174 = scmp.eq.s32.totalorder %s26, 1
      %p175 = por %p173, %p174
      %p177 = scmp.ne.s32.totalorder %s162, %s176
      %p178 = scmp.eq.s32.totalorder %s26, 0
      %p179 = por %p177, %p178
      %s180 = ssub.s32 %s20, %s27
      %p181 = scmp.eq.s32.totalorder %s180, 0
      %s183 = sadd.s32 %s182, 1
      %s184 = scalar_select %p181, %s182, %s183
      %p187 = pneg %p181
      %p188 = scmp.eq.s32.totalorder %s20, 1
      %p189 = por %p187, %p188
      %p190 = scmp.ne.s32.totalorder %s182, %s185
      %p191 = scmp.eq.s32.totalorder %s20, 0
      %p192 = por %p190, %p191
      %p193 = scmp.ne.s32.totalorder %s182, %s185
      %p194 = scmp.eq.s32.totalorder %s25, 1
      %p195 = por %p193, %p194
      %p196 = scmp.ne.s32.totalorder %s185, %s186
      %p197 = scmp.eq.s32.totalorder %s25, 0
      %p198 = por %p196, %p197
      %p199 = scmp.ne.s32.totalorder %s185, %s186
      %p200 = scmp.eq.s32.totalorder %s26, 1
      %p201 = por %p199, %p200
      %p203 = scmp.ne.s32.totalorder %s186, %s202
      %p204 = scmp.eq.s32.totalorder %s26, 0
      %p205 = por %p203, %p204
      %p206 = scmp.le.s32.totalorder 1, %s20
      %p207 = scmp.lt.s32.totalorder %s20, 3
      %p208 = pnand %p206, %p207
      %p209 = pneg %p208
      // Predicated region
      $region9: #{tpu_custom_call.1} parent=5 // pred_check
        _
      $region10: #{tpu_custom_call.1} parent=5 // pred_check_branch
        %211 = sbr.rel (%p208) target = $region12
      $region11: #{tpu_custom_call.1} parent=5 // pred_region
        %s212 = ssub.s32 %s20, 1
        // Predicated region
        $region13: #{tpu_custom_call.1} parent=11 // pred_check
          %p213 = pneg %p67
        $region14: #{tpu_custom_call.1} parent=11 // pred_check_branch
          %215 = sbr.rel (%p213) target = $region16
        $region15: #{tpu_custom_call.1} parent=11 // pred_region
          %s217 = ssub.s32 256, 256
          %218 = vsyncadd [#allocation6], %s217
          %s219 = sshll.u32 [#allocation5], 4
          %s220 = int_to_ptr.vmem [resolvable:$true] %s219
          %225 = dma.hbm_to_vmem [thread:$0]  %s1, 256, %s220, [#allocation6], 64, 64, 4
        $region16: #{tpu_custom_call.1} parent=11 // pred_fallthru
          _
        // Predicated region
        $region17: #{tpu_custom_call.1} parent=11 // pred_check
          %p226 = pneg %p88
        $region18: #{tpu_custom_call.1} parent=11 // pred_check_branch
          %228 = sbr.rel (%p226) target = $region20
        $region19: #{tpu_custom_call.1} parent=11 // pred_region
          _
        $region20: #{tpu_custom_call.1} parent=11 // pred_fallthru
          _
        // Predicated region
        $region21: #{tpu_custom_call.1} parent=11 // pred_check
          %p229 = pneg %p109
        $region22: #{tpu_custom_call.1} parent=11 // pred_check_branch
          %231 = sbr.rel (%p229) target = $region24
        $region23: #{tpu_custom_call.1} parent=11 // pred_region
          %s233 = ssub.s32 256, 256
          %234 = vsyncadd [#allocation6], %s233
          %s235 = sshll.u32 [#allocation7], 4
          %s236 = int_to_ptr.vmem [resolvable:$true] %s235
          %241 = dma.hbm_to_vmem [thread:$0]  %s3, 256, %s236, [#allocation6], 64, 64, 4
        $region24: #{tpu_custom_call.1} parent=11 // pred_fallthru
          _
        // Predicated region
        $region25: #{tpu_custom_call.1} parent=11 // pred_check
          %p242 = pneg %p130
        $region26: #{tpu_custom_call.1} parent=11 // pred_check_branch
          %244 = sbr.rel (%p242) target = $region28
        $region27: #{tpu_custom_call.1} parent=11 // pred_region
          _
        $region28: #{tpu_custom_call.1} parent=11 // pred_fallthru
          _
        // Predicated region
        $region29: #{tpu_custom_call.1} parent=11 // pred_check
          %p245 = pneg %p151
        $region30: #{tpu_custom_call.1} parent=11 // pred_check_branch
          %247 = sbr.rel (%p245) target = $region32
        $region31: #{tpu_custom_call.1} parent=11 // pred_region
          _
        $region32: #{tpu_custom_call.1} parent=11 // pred_fallthru
          _
        // Predicated region
        $region33: #{tpu_custom_call.1} parent=11 // pred_check
          %p248 = pneg %p172
        $region34: #{tpu_custom_call.1} parent=11 // pred_check_branch
          %250 = sbr.rel (%p248) target = $region36
        $region35: #{tpu_custom_call.1} parent=11 // pred_region
          _
        $region36: #{tpu_custom_call.1} parent=11 // pred_fallthru
          _
      $region12: #{tpu_custom_call.1} parent=5 // pred_fallthru
        _
      %p251 = scmp.lt.s32.totalorder %s20, 2
      // Predicated region
      $region37: #{tpu_custom_call.1} parent=5 // pred_check
        %p252 = pneg %p251
      $region38: #{tpu_custom_call.1} parent=5 // pred_check_branch
        %254 = sbr.rel (%p252) target = $region40
      $region39: #{tpu_custom_call.1} parent=5 // pred_region
        // Predicated region
        $region41: #{tpu_custom_call.1} parent=39 // pred_check
          %p255 = pneg %p40
        $region42: #{tpu_custom_call.1} parent=39 // pred_check_branch
          %257 = sbr.rel (%p255) target = $region44
        $region43: #{tpu_custom_call.1} parent=39 // pred_region
          %s258 = sand.u32 %s30, 1
          %s259 = scalar_lea.sflag [#allocation3], %s258
          %s260 = sand.u32 %s30, 1
          %s261 = smul.addr %s260, 8
          %s262 = scalar_lea.vmem [#allocation2], %s261
          %s264 = ssub.s32 128, 128
          %265 = vsyncadd %s259, %s264
          %s266 = smul.addr %s20, 128
          %s267 = scalar_lea.hbm %s0, %s266
          %s269 = sshll.u32 %s262, 4
          %s270 = int_to_ptr.vmem [resolvable:$true] %s269
          %272 = dma.hbm_to_vmem [thread:$0]  %s267, 128, %s270, %s259
        $region44: #{tpu_custom_call.1} parent=39 // pred_fallthru
          _
      $region40: #{tpu_custom_call.1} parent=5 // pred_fallthru
        _
      %p273 = scmp.le.s32.totalorder 1, %s20
      %p274 = scmp.lt.s32.totalorder %s20, 3
      %p275 = pnand %p273, %p274
      %p276 = pneg %p275
      // Predicated region
      $region45: #{tpu_custom_call.1} parent=5 // pred_check
        _
      $region46: #{tpu_custom_call.1} parent=5 // pred_check_branch
        %278 = sbr.rel (%p275) target = $region48
      $region47: #{tpu_custom_call.1} parent=5 // pred_region
        %s279 = ssub.s32 %s20, 1
        %s280 = sand.u32 %s33, 1
        %s281 = scalar_lea.sflag [#allocation3], %s280
        %s282 = sand.u32 %s33, 1
        %s283 = smul.addr %s282, 8
        %s284 = scalar_lea.vmem [#allocation2], %s283
        // Predicated region
        $region49: #{tpu_custom_call.1} parent=47 // pred_check
          %p285 = pneg %p46
        $region50: #{tpu_custom_call.1} parent=47 // pred_check_branch
          %287 = sbr.rel (%p285) target = $region52
        $region51: #{tpu_custom_call.1} parent=47 // pred_region
          %288 = dma.done %s281, 128
        $region52: #{tpu_custom_call.1} parent=47 // pred_fallthru
          _
        // Predicated region
        $region53: #{tpu_custom_call.1} parent=47 // pred_check
          %p289 = pneg %p67
        $region54: #{tpu_custom_call.1} parent=47 // pred_check_branch
          %291 = sbr.rel (%p289) target = $region56
        $region55: #{tpu_custom_call.1} parent=47 // pred_region
          %292 = dma.done [#allocation6], 256
        $region56: #{tpu_custom_call.1} parent=47 // pred_fallthru
          _
        // Predicated region
        $region57: #{tpu_custom_call.1} parent=47 // pred_check
          %p293 = pneg %p109
        $region58: #{tpu_custom_call.1} parent=47 // pred_check_branch
          %295 = sbr.rel (%p293) target = $region60
        $region59: #{tpu_custom_call.1} parent=47 // pred_region
          %296 = dma.done [#allocation6], 256
        $region60: #{tpu_custom_call.1} parent=47 // pred_fallthru
          _
        %s297 = sand.u32 %s33, 1
        %s298 = scalar_lea.sflag [#allocation3], %s297
        %s299 = sand.u32 %s33, 1
        %s300 = smul.addr %s299, 8
        %s301 = scalar_lea.vmem [#allocation2], %s300
        %p302 = pneg %p46
        %p303 = pneg %p43
        %p304 = pneg %p67
        %p305 = pneg %p64
        %p306 = pneg %p88
        %p307 = pneg %p85
        %p308 = pneg %p109
        %p309 = pneg %p106
        %p310 = pneg %p130
        %p311 = pneg %p127
        %p312 = pneg %p151
        %p313 = pneg %p148
        %p314 = pneg %p172
        %p315 = pneg %p169
        %p316 = pneg %p198
        %p317 = pneg %p195
        %s318 = sand.u32 %s185, 1
        %s319 = scalar_lea.sflag [#allocation4], %s318
        %s320 = sand.u32 %s185, 1
        %s321 = smul.addr %s320, 8
        %s322 = scalar_lea.vmem [#allocation8], %s321
        %v324 = vld [vmem:[%s284] sm:$0xff]
        %v325 = vpack.c.bf16 %v324, %v324
        %v326 = vld [vmem:[#allocation5] sm:$0xf]
        %v327 = vld [vmem:[#allocation5 + $0x4] sm:$0xf]
        %v328 = vld [vmem:[#allocation5 + $0x8] sm:$0xf]
        %v329 = vld [vmem:[#allocation5 + $0xc] sm:$0xf]
        %v330 = vld [vmem:[%s2] sm:$0x1]
        %v332 = vlaneseq
        %v333 = vshrl.u32 %v332, 7
        %v334 = vsub.s32 0, %v333
        %v335 = vrot.slane %v330, %v334
        %v341 = vunpack.c.l.b16 %v326
        %v342 = vunpack.c.l.b16 %v327
        %v343 = vunpack.c.l.b16 %v328
        %v344 = vunpack.c.l.b16 %v329
        %v345 = vpack.c.b16 %v342, %v341
        %v346 = vpack.c.b16 %v344, %v343
        %vm349 = vcmask 261120
        %v351 = vsel %vm349, %v325, 0
        %353 = vmatprep.subr.bf16.mxu0 0
        %354 = vmatpush1.bf16.msra.mxu0 %v345
        %355 = vmatprep.subr.bf16.mxu0 0
        %356 = vmatpush1.bf16.msra.mxu0 %v346
        %357 = vmatprep.subr.bf16.mxu0 0
        %358 = vmatpush1.bf16.msra.mxu0 0
        %359 = vmatprep.subr.bf16.mxu0 0
        %360 = vmatpush1.bf16.msra.mxu0 0
        %361 = vmatprep.subr.bf16.mxu0 0
        %362 = vmatpush1.bf16.msra.mxu0 0
        %363 = vmatprep.subr.bf16.mxu0 0
        %364 = vmatpush1.bf16.msra.mxu0 0
        %365 = vmatprep.subr.bf16.mxu0 0
        %366 = vmatpush1.bf16.msra.mxu0 0
        %367 = vmatprep.subr.bf16.mxu0 0
        %368 = vmatpush1.bf16.msra.mxu0 0
        %369 = vmatprep.subr.bf16.mxu0 0
        %370 = vmatpush1.bf16.msra.mxu0 0
        %371 = vmatprep.subr.bf16.mxu0 0
        %372 = vmatpush1.bf16.msra.mxu0 0
        %373 = vmatprep.subr.bf16.mxu0 0
        %374 = vmatpush1.bf16.msra.mxu0 0
        %375 = vmatprep.subr.bf16.mxu0 0
        %376 = vmatpush1.bf16.msra.mxu0 0
        %377 = vmatprep.subr.bf16.mxu0 0
        %378 = vmatpush1.bf16.msra.mxu0 0
        %379 = vmatprep.subr.bf16.mxu0 0
        %380 = vmatpush1.bf16.msra.mxu0 0
        %381 = vmatprep.subr.bf16.mxu0 0
        %382 = vmatpush1.bf16.msra.mxu0 0
        %383 = vmatprep.subr.bf16.mxu0 0
        %384 = vmatpush1.bf16.msra.mxu0 0
        %385 = vmatprep.mubr.bf16.mxu0 0
        %386 = vmatmul.mubr.bf16.gmra.mrb[0].mxu0 %v351
        %v387 = vpop.f32.mrb[0].mxu0
        %v388 = vadd.f32 %v335, %v387
        %v389 = vpop.f32.mrb[0].mxu0
        %v390 = vpop.f32.mrb[0].mxu0
        %v391 = vpop.f32.mrb[0].mxu0
        %392 = vdwg.mxu0
        %v393 = vpack.c.bf16 %v388, %v388
        %395 = vrot.lane.b32.xlu0 %v393, 120
        %v396 = vpop.permute.xlu0 %395
        %397 = vrot.lane.b32.xlu0 %v393, 112
        %v398 = vpop.permute.xlu0 %397
        %399 = vrot.lane.b32.xlu0 %v393, 104
        %v400 = vpop.permute.xlu0 %399
        %401 = vrot.lane.b32.xlu0 %v393, 96
        %v402 = vpop.permute.xlu0 %401
        %vm403 = vcmask 64512
        %v405 = vsel %vm403, %v393, 0
        %v408 = vsel %vm403, %v402, 0
        %410 = vmatprep.subr.bf16.mxu0 0
        %411 = vmatpush1.bf16.xpose.msra.mxu0 %v408
        %412 = vmatprep.subr.bf16.mxu0 0
        %413 = vmatpush1.bf16.xpose.msra.mxu0 0
        %414 = vmatprep.subr.bf16.mxu0 0
        %415 = vmatpush1.bf16.xpose.msra.mxu0 0
        %416 = vmatprep.subr.bf16.mxu0 0
        %417 = vmatpush1.bf16.xpose.msra.mxu0 0
        %418 = vmatprep.subr.bf16.mxu0 0
        %419 = vmatpush1.bf16.xpose.msra.mxu0 0
        %420 = vmatprep.subr.bf16.mxu0 0
        %421 = vmatpush1.bf16.xpose.msra.mxu0 0
        %422 = vmatprep.subr.bf16.mxu0 0
        %423 = vmatpush1.bf16.xpose.msra.mxu0 0
        %424 = vmatprep.subr.bf16.mxu0 0
        %425 = vmatpush1.bf16.xpose.msra.mxu0 0
        %426 = vmatprep.subr.bf16.mxu0 0
        %427 = vmatpush1.bf16.xpose.msra.mxu0 0
        %428 = vmatprep.subr.bf16.mxu0 0
        %429 = vmatpush1.bf16.xpose.msra.mxu0 0
        %430 = vmatprep.subr.bf16.mxu0 0
        %431 = vmatpush1.bf16.xpose.msra.mxu0 0
        %432 = vmatprep.subr.bf16.mxu0 0
        %433 = vmatpush1.bf16.xpose.msra.mxu0 0
        %434 = vmatprep.subr.bf16.mxu0 0
        %435 = vmatpush1.bf16.xpose.msra.mxu0 0
        %436 = vmatprep.subr.bf16.mxu0 0
        %437 = vmatpush1.bf16.xpose.msra.mxu0 0
        %438 = vmatprep.subr.bf16.mxu0 0
        %439 = vmatpush1.bf16.xpose.msra.mxu0 0
        %440 = vmatprep.subr.bf16.mxu0 0
        %441 = vmatpush1.bf16.xpose.msra.mxu0 0
        %442 = vmatprep.mubr.bf16.mxu0 0
        %443 = vmatmul.mubr.bf16.gmra.mrb[0].mxu0 %v405
        %v444 = vpop.f32.mrb[0].mxu0
        %v445 = vadd.f32 0.0, %v444
        %v446 = vpop.f32.mrb[0].mxu0
        %v447 = vpop.f32.mrb[0].mxu0
        %v448 = vpop.f32.mrb[0].mxu0
        %449 = vdwg.mxu0
        %450 = vrot.lane.b32.xlu0 %v396, 96
        %v451 = vpop.permute.xlu0 %450
        %v453 = vsel %vm403, %v396, 0
        %v456 = vsel %vm403, %v451, 0
        %458 = vmatprep.subr.bf16.mxu0 0
        %459 = vmatpush1.bf16.xpose.msra.mxu0 %v456
        %460 = vmatprep.subr.bf16.mxu0 0
        %461 = vmatpush1.bf16.xpose.msra.mxu0 0
        %462 = vmatprep.subr.bf16.mxu0 0
        %463 = vmatpush1.bf16.xpose.msra.mxu0 0
        %464 = vmatprep.subr.bf16.mxu0 0
        %465 = vmatpush1.bf16.xpose.msra.mxu0 0
        %466 = vmatprep.subr.bf16.mxu0 0
        %467 = vmatpush1.bf16.xpose.msra.mxu0 0
        %468 = vmatprep.subr.bf16.mxu0 0
        %469 = vmatpush1.bf16.xpose.msra.mxu0 0
        %470 = vmatprep.subr.bf16.mxu0 0
        %471 = vmatpush1.bf16.xpose.msra.mxu0 0
        %472 = vmatprep.subr.bf16.mxu0 0
        %473 = vmatpush1.bf16.xpose.msra.mxu0 0
        %474 = vmatprep.subr.bf16.mxu0 0
        %475 = vmatpush1.bf16.xpose.msra.mxu0 0
        %476 = vmatprep.subr.bf16.mxu0 0
        %477 = vmatpush1.bf16.xpose.msra.mxu0 0
        %478 = vmatprep.subr.bf16.mxu0 0
        %479 = vmatpush1.bf16.xpose.msra.mxu0 0
        %480 = vmatprep.subr.bf16.mxu0 0
        %481 = vmatpush1.bf16.xpose.msra.mxu0 0
        %482 = vmatprep.subr.bf16.mxu0 0
        %483 = vmatpush1.bf16.xpose.msra.mxu0 0
        %484 = vmatprep.subr.bf16.mxu0 0
        %485 = vmatpush1.bf16.xpose.msra.mxu0 0
        %486 = vmatprep.subr.bf16.mxu0 0
        %487 = vmatpush1.bf16.xpose.msra.mxu0 0
        %488 = vmatprep.subr.bf16.mxu0 0
        %489 = vmatpush1.bf16.xpose.msra.mxu0 0
        %490 = vmatprep.mubr.bf16.mxu0 0
        %491 = vmatmul.mubr.bf16.gmra.mrb[0].mxu0 %v453
        %v492 = vpop.f32.mrb[0].mxu0
        %v493 = vadd.f32 0.0, %v492
        %v494 = vpop.f32.mrb[0].mxu0
        %v495 = vpop.f32.mrb[0].mxu0
        %v496 = vpop.f32.mrb[0].mxu0
        %497 = vdwg.mxu0
        %498 = vrot.lane.b32.xlu0 %v398, 96
        %v499 = vpop.permute.xlu0 %498
        %v501 = vsel %vm403, %v398, 0
        %v504 = vsel %vm403, %v499, 0
        %506 = vmatprep.subr.bf16.mxu0 0
        %507 = vmatpush1.bf16.xpose.msra.mxu0 %v504
        %508 = vmatprep.subr.bf16.mxu0 0
        %509 = vmatpush1.bf16.xpose.msra.mxu0 0
        %510 = vmatprep.subr.bf16.mxu0 0
        %511 = vmatpush1.bf16.xpose.msra.mxu0 0
        %512 = vmatprep.subr.bf16.mxu0 0
        %513 = vmatpush1.bf16.xpose.msra.mxu0 0
        %514 = vmatprep.subr.bf16.mxu0 0
        %515 = vmatpush1.bf16.xpose.msra.mxu0 0
        %516 = vmatprep.subr.bf16.mxu0 0
        %517 = vmatpush1.bf16.xpose.msra.mxu0 0
        %518 = vmatprep.subr.bf16.mxu0 0
        %519 = vmatpush1.bf16.xpose.msra.mxu0 0
        %520 = vmatprep.subr.bf16.mxu0 0
        %521 = vmatpush1.bf16.xpose.msra.mxu0 0
        %522 = vmatprep.subr.bf16.mxu0 0
        %523 = vmatpush1.bf16.xpose.msra.mxu0 0
        %524 = vmatprep.subr.bf16.mxu0 0
        %525 = vmatpush1.bf16.xpose.msra.mxu0 0
        %526 = vmatprep.subr.bf16.mxu0 0
        %527 = vmatpush1.bf16.xpose.msra.mxu0 0
        %528 = vmatprep.subr.bf16.mxu0 0
        %529 = vmatpush1.bf16.xpose.msra.mxu0 0
        %530 = vmatprep.subr.bf16.mxu0 0
        %531 = vmatpush1.bf16.xpose.msra.mxu0 0
        %532 = vmatprep.subr.bf16.mxu0 0
        %533 = vmatpush1.bf16.xpose.msra.mxu0 0
        %534 = vmatprep.subr.bf16.mxu0 0
        %535 = vmatpush1.bf16.xpose.msra.mxu0 0
        %536 = vmatprep.subr.bf16.mxu0 0
        %537 = vmatpush1.bf16.xpose.msra.mxu0 0
        %538 = vmatprep.mubr.bf16.mxu0 0
        %539 = vmatmul.mubr.bf16.gmra.mrb[0].mxu0 %v501
        %v540 = vpop.f32.mrb[0].mxu0
        %v541 = vadd.f32 0.0, %v540
        %v542 = vpop.f32.mrb[0].mxu0
        %v543 = vpop.f32.mrb[0].mxu0
        %v544 = vpop.f32.mrb[0].mxu0
        %545 = vdwg.mxu0
        %546 = vrot.lane.b32.xlu0 %v400, 96
        %v547 = vpop.permute.xlu0 %546
        %v549 = vsel %vm403, %v400, 0
        %v552 = vsel %vm403, %v547, 0
        %554 = vmatprep.subr.bf16.mxu0 0
        %555 = vmatpush1.bf16.xpose.msra.mxu0 %v552
        %556 = vmatprep.subr.bf16.mxu0 0
        %557 = vmatpush1.bf16.xpose.msra.mxu0 0
        %558 = vmatprep.subr.bf16.mxu0 0
        %559 = vmatpush1.bf16.xpose.msra.mxu0 0
        %560 = vmatprep.subr.bf16.mxu0 0
        %561 = vmatpush1.bf16.xpose.msra.mxu0 0
        %562 = vmatprep.subr.bf16.mxu0 0
        %563 = vmatpush1.bf16.xpose.msra.mxu0 0
        %564 = vmatprep.subr.bf16.mxu0 0
        %565 = vmatpush1.bf16.xpose.msra.mxu0 0
        %566 = vmatprep.subr.bf16.mxu0 0
        %567 = vmatpush1.bf16.xpose.msra.mxu0 0
        %568 = vmatprep.subr.bf16.mxu0 0
        %569 = vmatpush1.bf16.xpose.msra.mxu0 0
        %570 = vmatprep.subr.bf16.mxu0 0
        %571 = vmatpush1.bf16.xpose.msra.mxu0 0
        %572 = vmatprep.subr.bf16.mxu0 0
        %573 = vmatpush1.bf16.xpose.msra.mxu0 0
        %574 = vmatprep.subr.bf16.mxu0 0
        %575 = vmatpush1.bf16.xpose.msra.mxu0 0
        %576 = vmatprep.subr.bf16.mxu0 0
        %577 = vmatpush1.bf16.xpose.msra.mxu0 0
        %578 = vmatprep.subr.bf16.mxu0 0
        %579 = vmatpush1.bf16.xpose.msra.mxu0 0
        %580 = vmatprep.subr.bf16.mxu0 0
        %581 = vmatpush1.bf16.xpose.msra.mxu0 0
        %582 = vmatprep.subr.bf16.mxu0 0
        %583 = vmatpush1.bf16.xpose.msra.mxu0 0
        %584 = vmatprep.subr.bf16.mxu0 0
        %585 = vmatpush1.bf16.xpose.msra.mxu0 0
        %586 = vmatprep.mubr.bf16.mxu0 0
        %587 = vmatmul.mubr.bf16.gmra.mrb[0].mxu0 %v549
        %v588 = vpop.f32.mrb[0].mxu0
        %v589 = vadd.f32 0.0, %v588
        %v590 = vpop.f32.mrb[0].mxu0
        %v591 = vpop.f32.mrb[0].mxu0
        %v592 = vpop.f32.mrb[0].mxu0
        %593 = vdwg.mxu0
        %v594 = vmul.f32 %v445, 0.35355338
        %v595 = vmul.f32 %v493, 0.35355338
        %v596 = vmul.f32 %v541, 0.35355338
        %v597 = vmul.f32 %v589, 0.35355338
        %v598 = vsel %vm403, %v594, -inf
        %599 = vmax.xlane.f32.xlu0 %v598
        %v600 = vpop.xlane.xlu0 %599
        %v601 = vsel %vm403, %v595, -inf
        %602 = vmax.xlane.f32.xlu0 %v601
        %v603 = vpop.xlane.xlu0 %602
        %v604 = vsel %vm403, %v596, -inf
        %605 = vmax.xlane.f32.xlu0 %v604
        %v606 = vpop.xlane.xlu0 %605
        %v607 = vsel %vm403, %v597, -inf
        %608 = vmax.xlane.f32.xlu0 %v607
        %v609 = vpop.xlane.xlu0 %608
        %v610 = vsub.f32 %v594, %v600
        %v611 = vsub.f32 %v595, %v603
        %v612 = vsub.f32 %v596, %v606
        %v613 = vsub.f32 %v597, %v609
        %v614 = vmul.f32 %v610, 1.442695
        %v615 = vpow.pop %v614
        %v616 = vmul.f32 %v611, 1.442695
        %v617 = vpow.pop %v616
        %v618 = vmul.f32 %v612, 1.442695
        %v619 = vpow.pop %v618
        %v620 = vmul.f32 %v613, 1.442695
        %v621 = vpow.pop %v620
        %v622 = vsel %vm403, %v615, 0.0
        %623 = vadd.xlane.f32.xlu0 %v622
        %v624 = vpop.xlane.xlu0 %623
        %v625 = vsel %vm403, %v617, 0.0
        %626 = vadd.xlane.f32.xlu0 %v625
        %v627 = vpop.xlane.xlu0 %626
        %v628 = vsel %vm403, %v619, 0.0
        %629 = vadd.xlane.f32.xlu0 %v628
        %v630 = vpop.xlane.xlu0 %629
        %v631 = vsel %vm403, %v621, 0.0
        %632 = vadd.xlane.f32.xlu0 %v631
        %v633 = vpop.xlane.xlu0 %632
        %v634 = vrcp.pop %v624
        %v635 = vrcp.pop %v627
        %v636 = vrcp.pop %v630
        %v637 = vrcp.pop %v633
        %v638 = vmul.f32 %v615, %v634
        %v639 = vmul.f32 %v617, %v635
        %v640 = vmul.f32 %v619, %v636
        %v641 = vmul.f32 %v621, %v637
        %v642 = vpack.c.bf16 %v638, %v638
        %v643 = vpack.c.bf16 %v639, %v639
        %v644 = vpack.c.bf16 %v640, %v640
        %v645 = vpack.c.bf16 %v641, %v641
        %646 = vrot.lane.b32.xlu0 %v393, 64
        %v647 = vpop.permute.xlu0 %646
        %v649 = vsel %vm403, %v642, 0
        %vm651 = vcmask 1043456
        %v653 = vsel %vm651, %v647, 0
        %655 = vmatprep.subr.bf16.mxu0 0
        %656 = vmatpush1.bf16.msra.mxu0 %v653
        %657 = vmatprep.subr.bf16.mxu0 0
        %658 = vmatpush1.bf16.msra.mxu0 0
        %659 = vmatprep.subr.bf16.mxu0 0
        %660 = vmatpush1.bf16.msra.mxu0 0
        %661 = vmatprep.subr.bf16.mxu0 0
        %662 = vmatpush1.bf16.msra.mxu0 0
        %663 = vmatprep.subr.bf16.mxu0 0
        %664 = vmatpush1.bf16.msra.mxu0 0
        %665 = vmatprep.subr.bf16.mxu0 0
        %666 = vmatpush1.bf16.msra.mxu0 0
        %667 = vmatprep.subr.bf16.mxu0 0
        %668 = vmatpush1.bf16.msra.mxu0 0
        %669 = vmatprep.subr.bf16.mxu0 0
        %670 = vmatpush1.bf16.msra.mxu0 0
        %671 = vmatprep.subr.bf16.mxu0 0
        %672 = vmatpush1.bf16.msra.mxu0 0
        %673 = vmatprep.subr.bf16.mxu0 0
        %674 = vmatpush1.bf16.msra.mxu0 0
        %675 = vmatprep.subr.bf16.mxu0 0
        %676 = vmatpush1.bf16.msra.mxu0 0
        %677 = vmatprep.subr.bf16.mxu0 0
        %678 = vmatpush1.bf16.msra.mxu0 0
        %679 = vmatprep.subr.bf16.mxu0 0
        %680 = vmatpush1.bf16.msra.mxu0 0
        %681 = vmatprep.subr.bf16.mxu0 0
        %682 = vmatpush1.bf16.msra.mxu0 0
        %683 = vmatprep.subr.bf16.mxu0 0
        %684 = vmatpush1.bf16.msra.mxu0 0
        %685 = vmatprep.subr.bf16.mxu0 0
        %686 = vmatpush1.bf16.msra.mxu0 0
        %687 = vmatprep.mubr.bf16.mxu0 0
        %688 = vmatmul.mubr.bf16.gmra.mrb[0].mxu0 %v649
        %v689 = vpop.f32.mrb[0].mxu0
        %v690 = vadd.f32 0.0, %v689
        %v691 = vpop.f32.mrb[0].mxu0
        %v692 = vpop.f32.mrb[0].mxu0
        %v693 = vpop.f32.mrb[0].mxu0
        %694 = vdwg.mxu0
        %695 = vrot.lane.b32.xlu0 %v396, 64
        %v696 = vpop.permute.xlu0 %695
        %v698 = vsel %vm403, %v643, 0
        %v701 = vsel %vm651, %v696, 0
        %703 = vmatprep.subr.bf16.mxu0 0
        %704 = vmatpush1.bf16.msra.mxu0 %v701
        %705 = vmatprep.subr.bf16.mxu0 0
        %706 = vmatpush1.bf16.msra.mxu0 0
        %707 = vmatprep.subr.bf16.mxu0 0
        %708 = vmatpush1.bf16.msra.mxu0 0
        %709 = vmatprep.subr.bf16.mxu0 0
        %710 = vmatpush1.bf16.msra.mxu0 0
        %711 = vmatprep.subr.bf16.mxu0 0
        %712 = vmatpush1.bf16.msra.mxu0 0
        %713 = vmatprep.subr.bf16.mxu0 0
        %714 = vmatpush1.bf16.msra.mxu0 0
        %715 = vmatprep.subr.bf16.mxu0 0
        %716 = vmatpush1.bf16.msra.mxu0 0
        %717 = vmatprep.subr.bf16.mxu0 0
        %718 = vmatpush1.bf16.msra.mxu0 0
        %719 = vmatprep.subr.bf16.mxu0 0
        %720 = vmatpush1.bf16.msra.mxu0 0
        %721 = vmatprep.subr.bf16.mxu0 0
        %722 = vmatpush1.bf16.msra.mxu0 0
        %723 = vmatprep.subr.bf16.mxu0 0
        %724 = vmatpush1.bf16.msra.mxu0 0
        %725 = vmatprep.subr.bf16.mxu0 0
        %726 = vmatpush1.bf16.msra.mxu0 0
        %727 = vmatprep.subr.bf16.mxu0 0
        %728 = vmatpush1.bf16.msra.mxu0 0
        %729 = vmatprep.subr.bf16.mxu0 0
        %730 = vmatpush1.bf16.msra.mxu0 0
        %731 = vmatprep.subr.bf16.mxu0 0
        %732 = vmatpush1.bf16.msra.mxu0 0
        %733 = vmatprep.subr.bf16.mxu0 0
        %734 = vmatpush1.bf16.msra.mxu0 0
        %735 = vmatprep.mubr.bf16.mxu0 0
        %736 = vmatmul.mubr.bf16.gmra.mrb[0].mxu0 %v698
        %v737 = vpop.f32.mrb[0].mxu0
        %v738 = vadd.f32 0.0, %v737
        %v739 = vpop.f32.mrb[0].mxu0
        %v740 = vpop.f32.mrb[0].mxu0
        %v741 = vpop.f32.mrb[0].mxu0
        %742 = vdwg.mxu0
        %743 = vrot.lane.b32.xlu0 %v398, 64
        %v744 = vpop.permute.xlu0 %743
        %v746 = vsel %vm403, %v644, 0
        %v749 = vsel %vm651, %v744, 0
        %751 = vmatprep.subr.bf16.mxu0 0
        %752 = vmatpush1.bf16.msra.mxu0 %v749
        %753 = vmatprep.subr.bf16.mxu0 0
        %754 = vmatpush1.bf16.msra.mxu0 0
        %755 = vmatprep.subr.bf16.mxu0 0
        %756 = vmatpush1.bf16.msra.mxu0 0
        %757 = vmatprep.subr.bf16.mxu0 0
        %758 = vmatpush1.bf16.msra.mxu0 0
        %759 = vmatprep.subr.bf16.mxu0 0
        %760 = vmatpush1.bf16.msra.mxu0 0
        %761 = vmatprep.subr.bf16.mxu0 0
        %762 = vmatpush1.bf16.msra.mxu0 0
        %763 = vmatprep.subr.bf16.mxu0 0
        %764 = vmatpush1.bf16.msra.mxu0 0
        %765 = vmatprep.subr.bf16.mxu0 0
        %766 = vmatpush1.bf16.msra.mxu0 0
        %767 = vmatprep.subr.bf16.mxu0 0
        %768 = vmatpush1.bf16.msra.mxu0 0
        %769 = vmatprep.subr.bf16.mxu0 0
        %770 = vmatpush1.bf16.msra.mxu0 0
        %771 = vmatprep.subr.bf16.mxu0 0
        %772 = vmatpush1.bf16.msra.mxu0 0
        %773 = vmatprep.subr.bf16.mxu0 0
        %774 = vmatpush1.bf16.msra.mxu0 0
        %775 = vmatprep.subr.bf16.mxu0 0
        %776 = vmatpush1.bf16.msra.mxu0 0
        %777 = vmatprep.subr.bf16.mxu0 0
        %778 = vmatpush1.bf16.msra.mxu0 0
        %779 = vmatprep.subr.bf16.mxu0 0
        %780 = vmatpush1.bf16.msra.mxu0 0
        %781 = vmatprep.subr.bf16.mxu0 0
        %782 = vmatpush1.bf16.msra.mxu0 0
        %783 = vmatprep.mubr.bf16.mxu0 0
        %784 = vmatmul.mubr.bf16.gmra.mrb[0].mxu0 %v746
        %v785 = vpop.f32.mrb[0].mxu0
        %v786 = vadd.f32 0.0, %v785
        %v787 = vpop.f32.mrb[0].mxu0
        %v788 = vpop.f32.mrb[0].mxu0
        %v789 = vpop.f32.mrb[0].mxu0
        %790 = vdwg.mxu0
        %791 = vrot.lane.b32.xlu0 %v400, 64
        %v792 = vpop.permute.xlu0 %791
        %v794 = vsel %vm403, %v645, 0
        %v797 = vsel %vm651, %v792, 0
        %799 = vmatprep.subr.bf16.mxu0 0
        %800 = vmatpush1.bf16.msra.mxu0 %v797
        %801 = vmatprep.subr.bf16.mxu0 0
        %802 = vmatpush1.bf16.msra.mxu0 0
        %803 = vmatprep.subr.bf16.mxu0 0
        %804 = vmatpush1.bf16.msra.mxu0 0
        %805 = vmatprep.subr.bf16.mxu0 0
        %806 = vmatpush1.bf16.msra.mxu0 0
        %807 = vmatprep.subr.bf16.mxu0 0
        %808 = vmatpush1.bf16.msra.mxu0 0
        %809 = vmatprep.subr.bf16.mxu0 0
        %810 = vmatpush1.bf16.msra.mxu0 0
        %811 = vmatprep.subr.bf16.mxu0 0
        %812 = vmatpush1.bf16.msra.mxu0 0
        %813 = vmatprep.subr.bf16.mxu0 0
        %814 = vmatpush1.bf16.msra.mxu0 0
        %815 = vmatprep.subr.bf16.mxu0 0
        %816 = vmatpush1.bf16.msra.mxu0 0
        %817 = vmatprep.subr.bf16.mxu0 0
        %818 = vmatpush1.bf16.msra.mxu0 0
        %819 = vmatprep.subr.bf16.mxu0 0
        %820 = vmatpush1.bf16.msra.mxu0 0
        %821 = vmatprep.subr.bf16.mxu0 0
        %822 = vmatpush1.bf16.msra.mxu0 0
        %823 = vmatprep.subr.bf16.mxu0 0
        %824 = vmatpush1.bf16.msra.mxu0 0
        %825 = vmatprep.subr.bf16.mxu0 0
        %826 = vmatpush1.bf16.msra.mxu0 0
        %827 = vmatprep.subr.bf16.mxu0 0
        %828 = vmatpush1.bf16.msra.mxu0 0
        %829 = vmatprep.subr.bf16.mxu0 0
        %830 = vmatpush1.bf16.msra.mxu0 0
        %831 = vmatprep.mubr.bf16.mxu0 0
        %832 = vmatmul.mubr.bf16.gmra.mrb[0].mxu0 %v794
        %v833 = vpop.f32.mrb[0].mxu0
        %v834 = vadd.f32 0.0, %v833
        %v835 = vpop.f32.mrb[0].mxu0
        %v836 = vpop.f32.mrb[0].mxu0
        %v837 = vpop.f32.mrb[0].mxu0
        %838 = vdwg.mxu0
        %840 = vrot.lane.b32.xlu0 %v738, 8
        %v841 = vpop.permute.xlu0 %840
        %844 = vrot.lane.b32.xlu0 %v786, 16
        %v845 = vpop.permute.xlu0 %844
        %848 = vrot.lane.b32.xlu0 %v834, 24
        %v849 = vpop.permute.xlu0 %848
        %v851 = vsel %vm403, %v690, %v841
        %vm852 = vcmask 130048
        %v853 = vsel %vm852, %v851, %v845
        %vm854 = vcmask 195584
        %v855 = vsel %vm854, %v853, %v849
        %v856 = vpack.c.bf16 %v855, %v855
        %v857 = vld [vmem:[#allocation7] sm:$0xf]
        %v858 = vld [vmem:[#allocation7 + $0x4] sm:$0xf]
        %v859 = vld [vmem:[#allocation7 + $0x8] sm:$0xf]
        %v860 = vld [vmem:[#allocation7 + $0xc] sm:$0xf]
        %v861 = vld [vmem:[%s4] sm:$0x1]
        %v863 = vlaneseq
        %v864 = vshrl.u32 %v863, 7
        %v865 = vsub.s32 0, %v864
        %v866 = vrot.slane %v861, %v865
        %v872 = vunpack.c.l.b16 %v857
        %v873 = vunpack.c.l.b16 %v858
        %v874 = vunpack.c.l.b16 %v859
        %v875 = vunpack.c.l.b16 %v860
        %v876 = vpack.c.b16 %v873, %v872
        %v877 = vpack.c.b16 %v875, %v874
        %v881 = vsel %vm349, %v856, 0
        %883 = vmatprep.subr.bf16.mxu0 0
        %884 = vmatpush1.bf16.msra.mxu0 %v876
        %885 = vmatprep.subr.bf16.mxu0 0
        %886 = vmatpush1.bf16.msra.mxu0 %v877
        %887 = vmatprep.subr.bf16.mxu0 0
        %888 = vmatpush1.bf16.msra.mxu0 0
        %889 = vmatprep.subr.bf16.mxu0 0
        %890 = vmatpush1.bf16.msra.mxu0 0
        %891 = vmatprep.subr.bf16.mxu0 0
        %892 = vmatpush1.bf16.msra.mxu0 0
        %893 = vmatprep.subr.bf16.mxu0 0
        %894 = vmatpush1.bf16.msra.mxu0 0
        %895 = vmatprep.subr.bf16.mxu0 0
        %896 = vmatpush1.bf16.msra.mxu0 0
        %897 = vmatprep.subr.bf16.mxu0 0
        %898 = vmatpush1.bf16.msra.mxu0 0
        %899 = vmatprep.subr.bf16.mxu0 0
        %900 = vmatpush1.bf16.msra.mxu0 0
        %901 = vmatprep.subr.bf16.mxu0 0
        %902 = vmatpush1.bf16.msra.mxu0 0
        %903 = vmatprep.subr.bf16.mxu0 0
        %904 = vmatpush1.bf16.msra.mxu0 0
        %905 = vmatprep.subr.bf16.mxu0 0
        %906 = vmatpush1.bf16.msra.mxu0 0
        %907 = vmatprep.subr.bf16.mxu0 0
        %908 = vmatpush1.bf16.msra.mxu0 0
        %909 = vmatprep.subr.bf16.mxu0 0
        %910 = vmatpush1.bf16.msra.mxu0 0
        %911 = vmatprep.subr.bf16.mxu0 0
        %912 = vmatpush1.bf16.msra.mxu0 0
        %913 = vmatprep.subr.bf16.mxu0 0
        %914 = vmatpush1.bf16.msra.mxu0 0
        %915 = vmatprep.mubr.bf16.mxu0 0
        %916 = vmatmul.mubr.bf16.gmra.mrb[0].mxu0 %v881
        %v917 = vpop.f32.mrb[0].mxu0
        %v918 = vadd.f32 %v866, %v917
        %v919 = vpop.f32.mrb[0].mxu0
        %v920 = vpop.f32.mrb[0].mxu0
        %v921 = vpop.f32.mrb[0].mxu0
        %922 = vdwg.mxu0
        %v923 = vadd.f32 %v324, %v918
        %v924 = vld [vmem:[%s5] sm:$0x1]
        %v925 = vld [vmem:[%s6] sm:$0x1]
        %v926 = vsel %vm349, %v923, 0.0
        %927 = vadd.xlane.f32.xlu0 %v926
        %v928 = vpop.xlane.xlu0 %927
        %v929 = vrcp.pop 32.0
        %v930 = vmul.f32 %v928, %v929
        %v931 = vsub.f32 %v923, %v930
        %v932 = vmul.f32 %v931, %v931
        %v933 = vsel %vm349, %v932, 0.0
        %934 = vadd.xlane.f32.xlu0 %v933
        %v935 = vpop.xlane.xlu0 %934
        %v936 = vmul.f32 %v935, %v929
        %v937 = vadd.f32 %v936, 1e-05
        %v938 = vrsqrt.pop %v937
        %v939 = vmul.f32 %v931, %v938
        %v941 = vlaneseq
        %v942 = vshrl.u32 %v941, 7
        %v943 = vsub.s32 0, %v942
        %v944 = vrot.slane %v924, %v943
        %v946 = vmul.f32 %v939, %v944
        %v948 = vlaneseq
        %v949 = vshrl.u32 %v948, 7
        %v950 = vsub.s32 0, %v949
        %v951 = vrot.slane %v925, %v950
        %v953 = vadd.f32 %v946, %v951
        %954 = vst.msk [vmem:[%s322] sm:$0xff] %vm349, %v953
        %s955 = sand.u32 %s185, 1
        %s956 = scalar_lea.sflag [#allocation4], %s955
        %s957 = sand.u32 %s185, 1
        %s958 = smul.addr %s957, 8
        %s959 = scalar_lea.vmem [#allocation8], %s958
        // Predicated region
        $region61: #{tpu_custom_call.1} parent=47 // pred_check
          %p960 = pneg %p195
        $region62: #{tpu_custom_call.1} parent=47 // pred_check_branch
          %962 = sbr.rel (%p960) target = $region64
        $region63: #{tpu_custom_call.1} parent=47 // pred_region
          %s964 = ssub.s32 128, 128
          %965 = vsyncadd %s956, %s964
          %s966 = smul.addr %s25, 128
          %s967 = scalar_lea.hbm %s7, %s966
          %s969 = sshll.u32 %s959, 4
          %s970 = int_to_ptr.vmem [resolvable:$true] %s969
          %972 = dma.vmem_to_hbm [thread:$0]  %s970, 128, %s967, %s956
        $region64: #{tpu_custom_call.1} parent=47 // pred_fallthru
          _
      $region48: #{tpu_custom_call.1} parent=5 // pred_fallthru
        _
      %p973 = scmp.le.s32.totalorder 2, %s20
      // Predicated region
      $region65: #{tpu_custom_call.1} parent=5 // pred_check
        %p974 = pneg %p973
      $region66: #{tpu_custom_call.1} parent=5 // pred_check_branch
        %976 = sbr.rel (%p974) target = $region68
      $region67: #{tpu_custom_call.1} parent=5 // pred_region
        %s977 = ssub.s32 %s20, 2
        // Predicated region
        $region69: #{tpu_custom_call.1} parent=67 // pred_check
          %p978 = pneg %p201
        $region70: #{tpu_custom_call.1} parent=67 // pred_check_branch
          %980 = sbr.rel (%p978) target = $region72
        $region71: #{tpu_custom_call.1} parent=67 // pred_region
          %s981 = sand.u32 %s186, 1
          %s982 = scalar_lea.sflag [#allocation4], %s981
          %s983 = sand.u32 %s186, 1
          %s984 = smul.addr %s983, 8
          %s985 = scalar_lea.vmem [#allocation8], %s984
          %986 = dma.done %s982, 128
        $region72: #{tpu_custom_call.1} parent=67 // pred_fallthru
          _
      $region68: #{tpu_custom_call.1} parent=5 // pred_fallthru
        _
    $region6: #{tpu_custom_call.1} parent=1 // loop_footer
      %s24 = sadd.s32 1, %s20
    $region7: #{tpu_custom_call.1} parent=1 // loop_footer_branch
      %19 = sbr.rel target = $region3
    $region8: #{tpu_custom_call.1} parent=1 // loop_exit
      _
    %987 = vsyncpa [#allocation3], 1
    %s988 = scalar_lea.sflag [#allocation3], 1
    %989 = vsyncpa %s988, 1
    %990 = vsyncpa [#allocation6], 1
    %991 = vsyncpa [#allocation4], 1
    %s992 = scalar_lea.sflag [#allocation4], 1
    %993 = vsyncpa %s992, 1

</llo_original>
